<compile_context>
chip_gen: v6e
topology: v6e:2x2x1
jax: 0.10.0
libtpu: 0.0.40
codegen_flags: <defaults>
</compile_context>

<pallas_src>
import jax
import jax.numpy as jnp
from jax.experimental import pallas as pl
from jax.experimental.pallas import tpu as pltpu

STATE_SIZE = 29
ACTION_SIZE = 15
EMBED = 128
NUM_HEADS = 4
HEAD_HIDDEN = EMBED // 2          # 64
HEAD_OUT = 1 + ACTION_SIZE        # 16 : col 0 = value, cols 1..15 = advantages
LN_EPS = 1e-5
NUM_BIG = 6                       # stacked 128x128 matrices in the weight slab
NUM_VEC_ROWS = 16                 # packed bias / LN-vector rows (14 used, padded to 16)

# The six per-segment encoders (joint/body/food/physics/action/ray) fused into
# ONE block-diagonal [29, 128] matmul: (in_start, in_end, out_start, out_end).
_SEGMENTS = (
    (0, 4, 0, 21),      # joint_encoder   Linear(4, 21)
    (4, 10, 21, 42),    # body_encoder    Linear(6, 21)
    (10, 14, 42, 63),   # food_encoder    Linear(4, 21)
    (14, 17, 63, 79),   # physics_encoder Linear(3, 16)
    (17, 19, 79, 95),   # action_encoder  Linear(2, 16)
    (19, 29, 95, 128),  # ray_encoder     Linear(10, 33)
)

# Rows of the packed [16,128] vector parameter.
(_B_ENC, _B_C1, _B_C2, _LN_G, _LN_B, _B_ATTN, _N1_G, _N1_B,
 _B_F1, _B_F2, _N2_G, _N2_B, _B_H1, _B_H2) = range(14)


def _round_up(x, m):
    return ((x + m - 1) // m) * m


def _layer_norm(x, g, b):
    # Single-pass: mean(x) and mean(x*x) are independent cross-lane reductions.
    mu = jnp.mean(x, axis=-1, keepdims=True)
    ms = jnp.mean(x * x, axis=-1, keepdims=True)
    var = ms - mu * mu
    return (x - mu) * jax.lax.rsqrt(var + LN_EPS) * g + b


def _bdot(x, w):
    """bf16 operands on the MXU, f32 accumulation."""
    return jnp.dot(x.astype(jnp.bfloat16), w, preferred_element_type=jnp.float32)


def _dqn_kernel(state_ref, w_enc_ref, w_big_ref, wh2_ref, vec_ref, q_ref, feat_ref):
    x = state_ref[...]                                                # [TB, 29] f32

    def wblk(i):                                                      # static slice -> view
        return w_big_ref[i * EMBED:(i + 1) * EMBED, :]

    def vec(i):                                                       # [128] f32 row
        return vec_ref[i, :]

    # --- EnhancedRobotEncoder: six segment Linears fused into one block-diagonal
    # matmul + ReLU (exactly equal to relu(cat([lin_i(seg_i)])) since the
    # off-diagonal blocks of w_enc are zero).
    h = jnp.maximum(_bdot(x, w_enc_ref[...]) + vec(_B_ENC), 0.0)
    # feature_combiner: Linear -> ReLU -> (Dropout=identity) -> Linear
    h = jnp.maximum(_bdot(h, wblk(0)) + vec(_B_C1), 0.0)
    h = _bdot(h, wblk(1)) + vec(_B_C2)
    feats = _layer_norm(h, vec(_LN_G), vec(_LN_B))                    # [TB, 128]

    # --- SimpleAttention with seq_len == 1: softmax == 1, attended == V, so the
    # V- and out-projections compose into a single folded matmul W_attn = wv@wo.
    attn_out = _bdot(feats, wblk(2)) + vec(_B_ATTN)
    feats = _layer_norm(feats + attn_out, vec(_N1_G), vec(_N1_B))     # norm1 (residual)

    # --- feed-forward block (Dropout = identity)
    f = jnp.maximum(_bdot(feats, wblk(3)) + vec(_B_F1), 0.0)
    f = _bdot(f, wblk(4)) + vec(_B_F2)
    feats = _layer_norm(feats + f, vec(_N2_G), vec(_N2_B))            # norm2 (residual)
    feat_ref[...] = feats

    # --- dueling heads, fused:
    #   wh1 = [value_head.0 | advantage_head.0]  -> one [128,128] matmul
    #   wh2 = blockdiag(value_head.2, advantage_head.2) -> one [128,16] matmul
    hh = jnp.maximum(_bdot(feats, wblk(5)) + vec(_B_H1), 0.0)         # [TB, 128]
    head = _bdot(hh, wh2_ref[...]) + vec_ref[_B_H2, 0:HEAD_OUT]       # [TB, 16]
    value = head[:, 0:1]
    adv = head[:, 1:HEAD_OUT]
    q_ref[...] = value + (adv - jnp.mean(adv, axis=-1, keepdims=True))


def forward(state, params, *, tile_b=2048):
    """Runs the fused forward pass; returns (q_values, aux) like the PyTorch module."""
    B = state.shape[0]
    # Batch tile: multiple of 8 (sublane).  Cap at ceil(B/2) so the "parallel"
    # grid axis has >= 2 steps for B > 8 (v7x has 2 TensorCores per chip);
    # irrelevant on v5e/v6e (1 TC).  Default 2048 amortizes the ~0.35 us
    # per-grid-step pipeline overhead while staying under the 32 MiB default
    # scoped VMEM limit on every generation (v7x included).
    half = _round_up(max((B + 1) // 2, 1), 8)
    TB = max(8, min(_round_up(tile_b, 8), half))
    B_pad = _round_up(B, TB)
    if B_pad != B:
        state = jnp.pad(state, ((0, B_pad - B), (0, 0)))
    grid = (B_pad // TB,)

    def batch_spec(cols):
        return pl.BlockSpec((TB, cols), lambda i: (i, 0))

    def weight_spec(p):
        # Full-extent block, same block index every step -> DMA'd once, VMEM-resident.
        return pl.BlockSpec(p.shape, lambda i: (0, 0))

    in_specs = [batch_spec(STATE_SIZE)] + [weight_spec(p) for p in params]
    out_specs = (batch_spec(ACTION_SIZE), batch_spec(EMBED))

    flops = 2 * B_pad * (STATE_SIZE * EMBED + NUM_BIG * EMBED * EMBED + EMBED * HEAD_OUT)
    bytes_w = int(sum(int(p.size) * p.dtype.itemsize for p in params))
    bytes_acc = bytes_w + B_pad * STATE_SIZE * 4 + B_pad * (ACTION_SIZE + EMBED) * 4
    cost = pl.CostEstimate(flops=flops, transcendentals=3 * B_pad,
                           bytes_accessed=bytes_acc)

    # Explicit VMEM budget only if the tile is pushed past 2048 rows
    # (lane-padded f32 I/O blocks are TB*128*4 bytes each, double-buffered;
    # ~8 live f32 [TB,128] intermediates; ~0.5 MiB of weights).
    vmem_limit = None
    if TB > 2048:
        vmem_limit = min(96 << 20, TB * (3 * 2 + 8) * EMBED * 4 + (2 << 20))

    q, feats = pl.pallas_call(
        _dqn_kernel,
        grid=grid,
        out_shape=(
            jax.ShapeDtypeStruct((B_pad, ACTION_SIZE), jnp.float32),
            jax.ShapeDtypeStruct((B_pad, EMBED), jnp.float32),
        ),
        in_specs=in_specs,
        out_specs=out_specs,
        compiler_params=pltpu.CompilerParams(
            dimension_semantics=("parallel",),
            vmem_limit_bytes=vmem_limit,
        ),
        cost_estimate=cost,
    )(state, *params)

    q = q[:B]
    feats = feats[:B]
    # Softmax over a length-1 sequence is identically 1.0 -> [B, H, 1, 1] of ones.
    attention_weights = jnp.ones((B, NUM_HEADS, 1, 1), jnp.float32)
    return q, {"attention_weights": attention_weights, "features": feats}


def forward_ref(state, params):
    """Pure-jnp reference mirroring the kernel math (bf16 operands, f32 accumulate)."""
    w_enc, w_big, wh2, vecs = params

    def W(i):
        return w_big[i * EMBED:(i + 1) * EMBED, :]

    def v(i):
        return vecs[i, :]

    h = jnp.maximum(_bdot(state, w_enc) + v(_B_ENC), 0.0)
    h = jnp.maximum(_bdot(h, W(0)) + v(_B_C1), 0.0)
    h = _bdot(h, W(1)) + v(_B_C2)
    feats = _layer_norm(h, v(_LN_G), v(_LN_B))
    feats = _layer_norm(feats + _bdot(feats, W(2)) + v(_B_ATTN), v(_N1_G), v(_N1_B))
    f = jnp.maximum(_bdot(feats, W(3)) + v(_B_F1), 0.0)
    feats = _layer_norm(feats + _bdot(f, W(4)) + v(_B_F2), v(_N2_G), v(_N2_B))
    hh = jnp.maximum(_bdot(feats, W(5)) + v(_B_H1), 0.0)
    head = _bdot(hh, wh2) + vecs[_B_H2, 0:HEAD_OUT]
    value, adv = head[:, :1], head[:, 1:]
    return value + (adv - jnp.mean(adv, axis=-1, keepdims=True)), feats


def init_params(key):
    keys = jax.random.split(key, 32)
    ki = iter(keys)

    def lin(fan_in, fan_out):
        k1, k2 = jax.random.split(next(ki))
        bound = 1.0 / float(fan_in) ** 0.5
        w = jax.random.uniform(k1, (fan_in, fan_out), jnp.float32, -bound, bound)
        b = jax.random.uniform(k2, (fan_out,), jnp.float32, -bound, bound)
        return w, b

    # Fused block-diagonal segment encoder [29, 128].
    w_enc = jnp.zeros((STATE_SIZE, EMBED), jnp.float32)
    b_enc = jnp.zeros((EMBED,), jnp.float32)
    for (r0, r1, c0, c1) in _SEGMENTS:
        w, b = lin(r1 - r0, c1 - c0)
        w_enc = w_enc.at[r0:r1, c0:c1].set(w)
        b_enc = b_enc.at[c0:c1].set(b)

    wc1, bc1 = lin(EMBED, EMBED)
    wc2, bc2 = lin(EMBED, EMBED)
    lng, lnb = jnp.ones((EMBED,), jnp.float32), jnp.zeros((EMBED,), jnp.float32)
    # NOTE: q_linear / k_linear of SimpleAttention are mathematically dead for
    # seq_len == 1 (softmax over one key is 1.0), so they are not materialized.
    wv, bv = lin(EMBED, EMBED)     # v_linear
    wo, bo = lin(EMBED, EMBED)     # out_linear
    # Fold V-projection + output-projection into one matmul (f32, then bf16).
    w_attn = jnp.dot(wv, wo, preferred_element_type=jnp.float32)
    b_attn = jnp.dot(bv, wo, preferred_element_type=jnp.float32) + bo
    n1g, n1b = jnp.ones((EMBED,), jnp.float32), jnp.zeros((EMBED,), jnp.float32)
    wf1, bf1 = lin(EMBED, EMBED)
    wf2, bf2 = lin(EMBED, EMBED)
    n2g, n2b = jnp.ones((EMBED,), jnp.float32), jnp.zeros((EMBED,), jnp.float32)

    # Dueling heads, fused.
    wv1, bv1 = lin(EMBED, HEAD_HIDDEN)        # value_head.0
    wv2, bv2 = lin(HEAD_HIDDEN, 1)            # value_head.2
    wa1, ba1 = lin(EMBED, HEAD_HIDDEN)        # advantage_head.0
    wa2, ba2 = lin(HEAD_HIDDEN, ACTION_SIZE)  # advantage_head.2
    wh1 = jnp.concatenate([wv1, wa1], axis=1)                     # [128, 128]
    bh1 = jnp.concatenate([bv1, ba1], axis=0)                     # [128]
    wh2 = jnp.zeros((EMBED, HEAD_OUT), jnp.float32)               # block-diagonal [128, 16]
    wh2 = wh2.at[:HEAD_HIDDEN, 0:1].set(wv2)
    wh2 = wh2.at[HEAD_HIDDEN:, 1:HEAD_OUT].set(wa2)
    bh2 = jnp.concatenate([bv2, ba2], axis=0)                     # [16]

    bf16 = jnp.bfloat16

    # Stack the six 128x128 matrices into one bf16 slab (one DMA descriptor).
    w_big = jnp.concatenate([wc1, wc2, w_attn, wf1, wf2, wh1], axis=0).astype(bf16)

    # Pack the 14 bias / LayerNorm vectors into one [16,128] f32 array.
    vecs = jnp.zeros((NUM_VEC_ROWS, EMBED), jnp.float32)
    vecs = vecs.at[_B_ENC].set(b_enc)
    vecs = vecs.at[_B_C1].set(bc1)
    vecs = vecs.at[_B_C2].set(bc2)
    vecs = vecs.at[_LN_G].set(lng)
    vecs = vecs.at[_LN_B].set(lnb)
    vecs = vecs.at[_B_ATTN].set(b_attn)
    vecs = vecs.at[_N1_G].set(n1g)
    vecs = vecs.at[_N1_B].set(n1b)
    vecs = vecs.at[_B_F1].set(bf1)
    vecs = vecs.at[_B_F2].set(bf2)
    vecs = vecs.at[_N2_G].set(n2g)
    vecs = vecs.at[_N2_B].set(n2b)
    vecs = vecs.at[_B_H1].set(bh1)
    vecs = vecs.at[_B_H2, 0:HEAD_OUT].set(bh2)

    return (w_enc.astype(bf16), w_big, wh2.astype(bf16), vecs)


if __name__ == "__main__":
    key = jax.random.PRNGKey(0)
    pkey, skey = jax.random.split(key)
    params = init_params(pkey)
    state = jax.random.normal(skey, (2, STATE_SIZE), dtype=jnp.float32)   # [B=2, 29]

    q_values, aux = forward(state, params)
    jax.block_until_ready((q_values, aux["features"], aux["attention_weights"]))

    assert q_values.shape == (2, ACTION_SIZE)
    assert aux["features"].shape == (2, EMBED)
    assert aux["attention_weights"].shape == (2, NUM_HEADS, 1, 1)

    q_ref, f_ref = forward_ref(state, params)
    assert jnp.allclose(q_values, q_ref, atol=1e-2, rtol=1e-2)
    assert jnp.allclose(aux["features"], f_ref, atol=1e-2, rtol=1e-2)
    assert jnp.allclose(aux["attention_weights"], jnp.ones((2, NUM_HEADS, 1, 1)))

    print("KERNEL_OK")
</pallas_src>

<mosaic_0001>
module attributes {stable_mosaic.version = 11 : i64} {
  func.func @_dqn_kernel(%arg0: i32, %arg1: memref<8x29xf32, #tpu.memory_space<vmem>>, %arg2: memref<29x128xbf16, #tpu.memory_space<vmem>>, %arg3: memref<768x128xbf16, #tpu.memory_space<vmem>>, %arg4: memref<128x16xbf16, #tpu.memory_space<vmem>>, %arg5: memref<16x128xf32, #tpu.memory_space<vmem>>, %arg6: memref<8x15xf32, #tpu.memory_space<vmem>>, %arg7: memref<8x128xf32, #tpu.memory_space<vmem>>) attributes {dimension_semantics = [#tpu.dimension_semantics<parallel>], iteration_bounds = array<i64: 1>, scalar_prefetch = 0 : i64, scratch_operands = 0 : i64, tpu.core_type = #tpu.core_type<tc>, window_params = [{transform_indices = @transform_0, window_bounds = array<i64: 8, 29>}, {pipeline_mode = #tpu.pipeline_mode<synchronous>, transform_indices = @transform_1, window_bounds = array<i64: 29, 128>}, {pipeline_mode = #tpu.pipeline_mode<synchronous>, transform_indices = @transform_2, window_bounds = array<i64: 768, 128>}, {pipeline_mode = #tpu.pipeline_mode<synchronous>, transform_indices = @transform_3, window_bounds = array<i64: 128, 16>}, {pipeline_mode = #tpu.pipeline_mode<synchronous>, transform_indices = @transform_4, window_bounds = array<i64: 16, 128>}, {transform_indices = @transform_5, window_bounds = array<i64: 8, 15>}, {transform_indices = @transform_6, window_bounds = array<i64: 8, 128>}]} {
    %c0 = arith.constant 0 : index
    %c0_0 = arith.constant 0 : index
    %0 = vector.load %arg1[%c0, %c0_0] : memref<8x29xf32, #tpu.memory_space<vmem>>, vector<8x29xf32>
    %c0_1 = arith.constant 0 : index
    %c0_2 = arith.constant 0 : index
    %1 = vector.load %arg2[%c0_1, %c0_2] : memref<29x128xbf16, #tpu.memory_space<vmem>>, vector<29x128xbf16>
    %2 = arith.truncf %0 : vector<8x29xf32> to vector<8x29xbf16>
    %cst = arith.constant dense<0.000000e+00> : vector<8x128xf32>
    %3 = tpu.matmul %2, %1, %cst {dimension_numbers = #tpu.dot_dimension_numbers<[1], [0], [0], [1], [0, 0, 1, 1], [], []>} : vector<8x29xbf16>, vector<29x128xbf16>, vector<8x128xf32> -> vector<8x128xf32>
    %c0_3 = arith.constant 0 : index
    %c0_4 = arith.constant 0 : index
    %4 = vector.load %arg5[%c0_3, %c0_4] : memref<16x128xf32, #tpu.memory_space<vmem>>, vector<1x128xf32>
    %5 = vector.shape_cast %4 : vector<1x128xf32> to vector<128xf32>
    %6 = vector.shape_cast %5 : vector<128xf32> to vector<1x128xf32>
    %7 = vector.broadcast %6 : vector<1x128xf32> to vector<8x128xf32>
    %8 = arith.addf %3, %7 : vector<8x128xf32>
    %cst_5 = arith.constant 0.000000e+00 : f32
    %9 = vector.broadcast %cst_5 : f32 to vector<8x128xf32>
    %10 = arith.maximumf %8, %9 : vector<8x128xf32>
    %c0_6 = arith.constant 0 : index
    %c0_7 = arith.constant 0 : index
    %11 = vector.load %arg3[%c0_6, %c0_7] : memref<768x128xbf16, #tpu.memory_space<vmem>>, vector<128x128xbf16>
    %12 = arith.truncf %10 : vector<8x128xf32> to vector<8x128xbf16>
    %cst_8 = arith.constant dense<0.000000e+00> : vector<8x128xf32>
    %13 = tpu.matmul %12, %11, %cst_8 {dimension_numbers = #tpu.dot_dimension_numbers<[1], [0], [0], [1], [0, 0, 1, 1], [], []>} : vector<8x128xbf16>, vector<128x128xbf16>, vector<8x128xf32> -> vector<8x128xf32>
    %c1 = arith.constant 1 : index
    %c0_9 = arith.constant 0 : index
    %14 = vector.load %arg5[%c1, %c0_9] : memref<16x128xf32, #tpu.memory_space<vmem>>, vector<1x128xf32>
    %15 = vector.shape_cast %14 : vector<1x128xf32> to vector<128xf32>
    %16 = vector.shape_cast %15 : vector<128xf32> to vector<1x128xf32>
    %17 = vector.broadcast %16 : vector<1x128xf32> to vector<8x128xf32>
    %18 = arith.addf %13, %17 : vector<8x128xf32>
    %cst_10 = arith.constant 0.000000e+00 : f32
    %19 = vector.broadcast %cst_10 : f32 to vector<8x128xf32>
    %20 = arith.maximumf %18, %19 : vector<8x128xf32>
    %c128 = arith.constant 128 : index
    %c0_11 = arith.constant 0 : index
    %21 = vector.load %arg3[%c128, %c0_11] : memref<768x128xbf16, #tpu.memory_space<vmem>>, vector<128x128xbf16>
    %22 = arith.truncf %20 : vector<8x128xf32> to vector<8x128xbf16>
    %cst_12 = arith.constant dense<0.000000e+00> : vector<8x128xf32>
    %23 = tpu.matmul %22, %21, %cst_12 {dimension_numbers = #tpu.dot_dimension_numbers<[1], [0], [0], [1], [0, 0, 1, 1], [], []>} : vector<8x128xbf16>, vector<128x128xbf16>, vector<8x128xf32> -> vector<8x128xf32>
    %c2 = arith.constant 2 : index
    %c0_13 = arith.constant 0 : index
    %24 = vector.load %arg5[%c2, %c0_13] : memref<16x128xf32, #tpu.memory_space<vmem>>, vector<1x128xf32>
    %25 = vector.shape_cast %24 : vector<1x128xf32> to vector<128xf32>
    %26 = vector.shape_cast %25 : vector<128xf32> to vector<1x128xf32>
    %27 = vector.broadcast %26 : vector<1x128xf32> to vector<8x128xf32>
    %28 = arith.addf %23, %27 : vector<8x128xf32>
    %c3 = arith.constant 3 : index
    %c0_14 = arith.constant 0 : index
    %29 = vector.load %arg5[%c3, %c0_14] : memref<16x128xf32, #tpu.memory_space<vmem>>, vector<1x128xf32>
    %30 = vector.shape_cast %29 : vector<1x128xf32> to vector<128xf32>
    %c4 = arith.constant 4 : index
    %c0_15 = arith.constant 0 : index
    %31 = vector.load %arg5[%c4, %c0_15] : memref<16x128xf32, #tpu.memory_space<vmem>>, vector<1x128xf32>
    %32 = vector.shape_cast %31 : vector<1x128xf32> to vector<128xf32>
    %cst_16 = arith.constant dense<0.000000e+00> : vector<8xf32>
    %33 = vector.multi_reduction <add>, %28, %cst_16 [1] : vector<8x128xf32> to vector<8xf32>
    %34 = vector.shape_cast %33 : vector<8xf32> to vector<8x1xf32>
    %cst_17 = arith.constant 1.280000e+02 : f32
    %35 = vector.broadcast %cst_17 : f32 to vector<8x1xf32>
    %36 = arith.divf %34, %35 : vector<8x1xf32>
    %37 = arith.mulf %28, %28 : vector<8x128xf32>
    %cst_18 = arith.constant dense<0.000000e+00> : vector<8xf32>
    %38 = vector.multi_reduction <add>, %37, %cst_18 [1] : vector<8x128xf32> to vector<8xf32>
    %39 = vector.shape_cast %38 : vector<8xf32> to vector<8x1xf32>
    %cst_19 = arith.constant 1.280000e+02 : f32
    %40 = vector.broadcast %cst_19 : f32 to vector<8x1xf32>
    %41 = arith.divf %39, %40 : vector<8x1xf32>
    %42 = arith.mulf %36, %36 : vector<8x1xf32>
    %43 = arith.subf %41, %42 : vector<8x1xf32>
    %44 = vector.broadcast %36 : vector<8x1xf32> to vector<8x128xf32>
    %45 = arith.subf %28, %44 : vector<8x128xf32>
    %cst_20 = arith.constant 9.99999974E-6 : f32
    %46 = vector.broadcast %cst_20 : f32 to vector<8x1xf32>
    %47 = arith.addf %43, %46 : vector<8x1xf32>
    %48 = math.rsqrt %47 : vector<8x1xf32>
    %49 = vector.broadcast %48 : vector<8x1xf32> to vector<8x128xf32>
    %50 = arith.mulf %45, %49 : vector<8x128xf32>
    %51 = vector.shape_cast %30 : vector<128xf32> to vector<1x128xf32>
    %52 = vector.broadcast %51 : vector<1x128xf32> to vector<8x128xf32>
    %53 = arith.mulf %50, %52 : vector<8x128xf32>
    %54 = vector.shape_cast %32 : vector<128xf32> to vector<1x128xf32>
    %55 = vector.broadcast %54 : vector<1x128xf32> to vector<8x128xf32>
    %56 = arith.addf %53, %55 : vector<8x128xf32>
    %c256 = arith.constant 256 : index
    %c0_21 = arith.constant 0 : index
    %57 = vector.load %arg3[%c256, %c0_21] : memref<768x128xbf16, #tpu.memory_space<vmem>>, vector<128x128xbf16>
    %58 = arith.truncf %56 : vector<8x128xf32> to vector<8x128xbf16>
    %cst_22 = arith.constant dense<0.000000e+00> : vector<8x128xf32>
    %59 = tpu.matmul %58, %57, %cst_22 {dimension_numbers = #tpu.dot_dimension_numbers<[1], [0], [0], [1], [0, 0, 1, 1], [], []>} : vector<8x128xbf16>, vector<128x128xbf16>, vector<8x128xf32> -> vector<8x128xf32>
    %c5 = arith.constant 5 : index
    %c0_23 = arith.constant 0 : index
    %60 = vector.load %arg5[%c5, %c0_23] : memref<16x128xf32, #tpu.memory_space<vmem>>, vector<1x128xf32>
    %61 = vector.shape_cast %60 : vector<1x128xf32> to vector<128xf32>
    %62 = vector.shape_cast %61 : vector<128xf32> to vector<1x128xf32>
    %63 = vector.broadcast %62 : vector<1x128xf32> to vector<8x128xf32>
    %64 = arith.addf %59, %63 : vector<8x128xf32>
    %65 = arith.addf %56, %64 : vector<8x128xf32>
    %c6 = arith.constant 6 : index
    %c0_24 = arith.constant 0 : index
    %66 = vector.load %arg5[%c6, %c0_24] : memref<16x128xf32, #tpu.memory_space<vmem>>, vector<1x128xf32>
    %67 = vector.shape_cast %66 : vector<1x128xf32> to vector<128xf32>
    %c7 = arith.constant 7 : index
    %c0_25 = arith.constant 0 : index
    %68 = vector.load %arg5[%c7, %c0_25] : memref<16x128xf32, #tpu.memory_space<vmem>>, vector<1x128xf32>
    %69 = vector.shape_cast %68 : vector<1x128xf32> to vector<128xf32>
    %cst_26 = arith.constant dense<0.000000e+00> : vector<8xf32>
    %70 = vector.multi_reduction <add>, %65, %cst_26 [1] : vector<8x128xf32> to vector<8xf32>
    %71 = vector.shape_cast %70 : vector<8xf32> to vector<8x1xf32>
    %cst_27 = arith.constant 1.280000e+02 : f32
    %72 = vector.broadcast %cst_27 : f32 to vector<8x1xf32>
    %73 = arith.divf %71, %72 : vector<8x1xf32>
    %74 = arith.mulf %65, %65 : vector<8x128xf32>
    %cst_28 = arith.constant dense<0.000000e+00> : vector<8xf32>
    %75 = vector.multi_reduction <add>, %74, %cst_28 [1] : vector<8x128xf32> to vector<8xf32>
    %76 = vector.shape_cast %75 : vector<8xf32> to vector<8x1xf32>
    %cst_29 = arith.constant 1.280000e+02 : f32
    %77 = vector.broadcast %cst_29 : f32 to vector<8x1xf32>
    %78 = arith.divf %76, %77 : vector<8x1xf32>
    %79 = arith.mulf %73, %73 : vector<8x1xf32>
    %80 = arith.subf %78, %79 : vector<8x1xf32>
    %81 = vector.broadcast %73 : vector<8x1xf32> to vector<8x128xf32>
    %82 = arith.subf %65, %81 : vector<8x128xf32>
    %cst_30 = arith.constant 9.99999974E-6 : f32
    %83 = vector.broadcast %cst_30 : f32 to vector<8x1xf32>
    %84 = arith.addf %80, %83 : vector<8x1xf32>
    %85 = math.rsqrt %84 : vector<8x1xf32>
    %86 = vector.broadcast %85 : vector<8x1xf32> to vector<8x128xf32>
    %87 = arith.mulf %82, %86 : vector<8x128xf32>
    %88 = vector.shape_cast %67 : vector<128xf32> to vector<1x128xf32>
    %89 = vector.broadcast %88 : vector<1x128xf32> to vector<8x128xf32>
    %90 = arith.mulf %87, %89 : vector<8x128xf32>
    %91 = vector.shape_cast %69 : vector<128xf32> to vector<1x128xf32>
    %92 = vector.broadcast %91 : vector<1x128xf32> to vector<8x128xf32>
    %93 = arith.addf %90, %92 : vector<8x128xf32>
    %c384 = arith.constant 384 : index
    %c0_31 = arith.constant 0 : index
    %94 = vector.load %arg3[%c384, %c0_31] : memref<768x128xbf16, #tpu.memory_space<vmem>>, vector<128x128xbf16>
    %95 = arith.truncf %93 : vector<8x128xf32> to vector<8x128xbf16>
    %cst_32 = arith.constant dense<0.000000e+00> : vector<8x128xf32>
    %96 = tpu.matmul %95, %94, %cst_32 {dimension_numbers = #tpu.dot_dimension_numbers<[1], [0], [0], [1], [0, 0, 1, 1], [], []>} : vector<8x128xbf16>, vector<128x128xbf16>, vector<8x128xf32> -> vector<8x128xf32>
    %c8 = arith.constant 8 : index
    %c0_33 = arith.constant 0 : index
    %97 = vector.load %arg5[%c8, %c0_33] : memref<16x128xf32, #tpu.memory_space<vmem>>, vector<1x128xf32>
    %98 = vector.shape_cast %97 : vector<1x128xf32> to vector<128xf32>
    %99 = vector.shape_cast %98 : vector<128xf32> to vector<1x128xf32>
    %100 = vector.broadcast %99 : vector<1x128xf32> to vector<8x128xf32>
    %101 = arith.addf %96, %100 : vector<8x128xf32>
    %cst_34 = arith.constant 0.000000e+00 : f32
    %102 = vector.broadcast %cst_34 : f32 to vector<8x128xf32>
    %103 = arith.maximumf %101, %102 : vector<8x128xf32>
    %c512 = arith.constant 512 : index
    %c0_35 = arith.constant 0 : index
    %104 = vector.load %arg3[%c512, %c0_35] : memref<768x128xbf16, #tpu.memory_space<vmem>>, vector<128x128xbf16>
    %105 = arith.truncf %103 : vector<8x128xf32> to vector<8x128xbf16>
    %cst_36 = arith.constant dense<0.000000e+00> : vector<8x128xf32>
    %106 = tpu.matmul %105, %104, %cst_36 {dimension_numbers = #tpu.dot_dimension_numbers<[1], [0], [0], [1], [0, 0, 1, 1], [], []>} : vector<8x128xbf16>, vector<128x128xbf16>, vector<8x128xf32> -> vector<8x128xf32>
    %c9 = arith.constant 9 : index
    %c0_37 = arith.constant 0 : index
    %107 = vector.load %arg5[%c9, %c0_37] : memref<16x128xf32, #tpu.memory_space<vmem>>, vector<1x128xf32>
    %108 = vector.shape_cast %107 : vector<1x128xf32> to vector<128xf32>
    %109 = vector.shape_cast %108 : vector<128xf32> to vector<1x128xf32>
    %110 = vector.broadcast %109 : vector<1x128xf32> to vector<8x128xf32>
    %111 = arith.addf %106, %110 : vector<8x128xf32>
    %112 = arith.addf %93, %111 : vector<8x128xf32>
    %c10 = arith.constant 10 : index
    %c0_38 = arith.constant 0 : index
    %113 = vector.load %arg5[%c10, %c0_38] : memref<16x128xf32, #tpu.memory_space<vmem>>, vector<1x128xf32>
    %114 = vector.shape_cast %113 : vector<1x128xf32> to vector<128xf32>
    %c11 = arith.constant 11 : index
    %c0_39 = arith.constant 0 : index
    %115 = vector.load %arg5[%c11, %c0_39] : memref<16x128xf32, #tpu.memory_space<vmem>>, vector<1x128xf32>
    %116 = vector.shape_cast %115 : vector<1x128xf32> to vector<128xf32>
    %cst_40 = arith.constant dense<0.000000e+00> : vector<8xf32>
    %117 = vector.multi_reduction <add>, %112, %cst_40 [1] : vector<8x128xf32> to vector<8xf32>
    %118 = vector.shape_cast %117 : vector<8xf32> to vector<8x1xf32>
    %cst_41 = arith.constant 1.280000e+02 : f32
    %119 = vector.broadcast %cst_41 : f32 to vector<8x1xf32>
    %120 = arith.divf %118, %119 : vector<8x1xf32>
    %121 = arith.mulf %112, %112 : vector<8x128xf32>
    %cst_42 = arith.constant dense<0.000000e+00> : vector<8xf32>
    %122 = vector.multi_reduction <add>, %121, %cst_42 [1] : vector<8x128xf32> to vector<8xf32>
    %123 = vector.shape_cast %122 : vector<8xf32> to vector<8x1xf32>
    %cst_43 = arith.constant 1.280000e+02 : f32
    %124 = vector.broadcast %cst_43 : f32 to vector<8x1xf32>
    %125 = arith.divf %123, %124 : vector<8x1xf32>
    %126 = arith.mulf %120, %120 : vector<8x1xf32>
    %127 = arith.subf %125, %126 : vector<8x1xf32>
    %128 = vector.broadcast %120 : vector<8x1xf32> to vector<8x128xf32>
    %129 = arith.subf %112, %128 : vector<8x128xf32>
    %cst_44 = arith.constant 9.99999974E-6 : f32
    %130 = vector.broadcast %cst_44 : f32 to vector<8x1xf32>
    %131 = arith.addf %127, %130 : vector<8x1xf32>
    %132 = math.rsqrt %131 : vector<8x1xf32>
    %133 = vector.broadcast %132 : vector<8x1xf32> to vector<8x128xf32>
    %134 = arith.mulf %129, %133 : vector<8x128xf32>
    %135 = vector.shape_cast %114 : vector<128xf32> to vector<1x128xf32>
    %136 = vector.broadcast %135 : vector<1x128xf32> to vector<8x128xf32>
    %137 = arith.mulf %134, %136 : vector<8x128xf32>
    %138 = vector.shape_cast %116 : vector<128xf32> to vector<1x128xf32>
    %139 = vector.broadcast %138 : vector<1x128xf32> to vector<8x128xf32>
    %140 = arith.addf %137, %139 : vector<8x128xf32>
    %c0_45 = arith.constant 0 : index
    %c0_46 = arith.constant 0 : index
    %141 = vector.load %arg7[%c0_45, %c0_46] : memref<8x128xf32, #tpu.memory_space<vmem>>, vector<8x128xf32>
    tpu.vector_store %arg7[%c0_45, %c0_46], %140 {strides = array<i32>} : memref<8x128xf32, #tpu.memory_space<vmem>>, vector<8x128xf32>,
    %c640 = arith.constant 640 : index
    %c0_47 = arith.constant 0 : index
    %142 = vector.load %arg3[%c640, %c0_47] : memref<768x128xbf16, #tpu.memory_space<vmem>>, vector<128x128xbf16>
    %143 = arith.truncf %140 : vector<8x128xf32> to vector<8x128xbf16>
    %cst_48 = arith.constant dense<0.000000e+00> : vector<8x128xf32>
    %144 = tpu.matmul %143, %142, %cst_48 {dimension_numbers = #tpu.dot_dimension_numbers<[1], [0], [0], [1], [0, 0, 1, 1], [], []>} : vector<8x128xbf16>, vector<128x128xbf16>, vector<8x128xf32> -> vector<8x128xf32>
    %c12 = arith.constant 12 : index
    %c0_49 = arith.constant 0 : index
    %145 = vector.load %arg5[%c12, %c0_49] : memref<16x128xf32, #tpu.memory_space<vmem>>, vector<1x128xf32>
    %146 = vector.shape_cast %145 : vector<1x128xf32> to vector<128xf32>
    %147 = vector.shape_cast %146 : vector<128xf32> to vector<1x128xf32>
    %148 = vector.broadcast %147 : vector<1x128xf32> to vector<8x128xf32>
    %149 = arith.addf %144, %148 : vector<8x128xf32>
    %cst_50 = arith.constant 0.000000e+00 : f32
    %150 = vector.broadcast %cst_50 : f32 to vector<8x128xf32>
    %151 = arith.maximumf %149, %150 : vector<8x128xf32>
    %c0_51 = arith.constant 0 : index
    %c0_52 = arith.constant 0 : index
    %152 = vector.load %arg4[%c0_51, %c0_52] : memref<128x16xbf16, #tpu.memory_space<vmem>>, vector<128x16xbf16>
    %153 = arith.truncf %151 : vector<8x128xf32> to vector<8x128xbf16>
    %cst_53 = arith.constant dense<0.000000e+00> : vector<8x16xf32>
    %154 = tpu.matmul %153, %152, %cst_53 {dimension_numbers = #tpu.dot_dimension_numbers<[1], [0], [0], [1], [0, 0, 1, 1], [], []>} : vector<8x128xbf16>, vector<128x16xbf16>, vector<8x16xf32> -> vector<8x16xf32>
    %c13 = arith.constant 13 : index
    %c0_54 = arith.constant 0 : index
    %155 = vector.load %arg5[%c13, %c0_54] : memref<16x128xf32, #tpu.memory_space<vmem>>, vector<1x16xf32>
    %156 = vector.shape_cast %155 : vector<1x16xf32> to vector<16xf32>
    %157 = vector.shape_cast %156 : vector<16xf32> to vector<1x16xf32>
    %158 = vector.broadcast %157 : vector<1x16xf32> to vector<8x16xf32>
    %159 = arith.addf %154, %158 : vector<8x16xf32>
    %160 = vector.extract_strided_slice %159 {offsets = [0, 0], sizes = [8, 1], strides = [1, 1]} : vector<8x16xf32> to vector<8x1xf32>
    %161 = vector.extract_strided_slice %159 {offsets = [0, 1], sizes = [8, 15], strides = [1, 1]} : vector<8x16xf32> to vector<8x15xf32>
    %cst_55 = arith.constant dense<0.000000e+00> : vector<8xf32>
    %162 = vector.multi_reduction <add>, %161, %cst_55 [1] : vector<8x15xf32> to vector<8xf32>
    %163 = vector.shape_cast %162 : vector<8xf32> to vector<8x1xf32>
    %cst_56 = arith.constant 1.500000e+01 : f32
    %164 = vector.broadcast %cst_56 : f32 to vector<8x1xf32>
    %165 = arith.divf %163, %164 : vector<8x1xf32>
    %166 = vector.broadcast %165 : vector<8x1xf32> to vector<8x15xf32>
    %167 = arith.subf %161, %166 : vector<8x15xf32>
    %168 = vector.broadcast %160 : vector<8x1xf32> to vector<8x15xf32>
    %169 = arith.addf %168, %167 : vector<8x15xf32>
    %c0_57 = arith.constant 0 : index
    %c0_58 = arith.constant 0 : index
    %170 = vector.load %arg6[%c0_57, %c0_58] : memref<8x15xf32, #tpu.memory_space<vmem>>, vector<8x15xf32>
    tpu.vector_store %arg6[%c0_57, %c0_58], %169 {strides = array<i32>} : memref<8x15xf32, #tpu.memory_space<vmem>>, vector<8x15xf32>,
    return
  }
  func.func @transform_0(%arg0: i32) -> (i32, i32) {
    %c0_i32 = arith.constant 0 : i32
    %c0_i32_0 = arith.constant 0 : i32
    return %arg0, %c0_i32 : i32, i32
  }
  func.func @transform_1(%arg0: i32) -> (i32, i32) {
    %c0_i32 = arith.constant 0 : i32
    %c0_i32_0 = arith.constant 0 : i32
    %c0_i32_1 = arith.constant 0 : i32
    return %c0_i32, %c0_i32_0 : i32, i32
  }
  func.func @transform_2(%arg0: i32) -> (i32, i32) {
    %c0_i32 = arith.constant 0 : i32
    %c0_i32_0 = arith.constant 0 : i32
    %c0_i32_1 = arith.constant 0 : i32
    return %c0_i32, %c0_i32_0 : i32, i32
  }
  func.func @transform_3(%arg0: i32) -> (i32, i32) {
    %c0_i32 = arith.constant 0 : i32
    %c0_i32_0 = arith.constant 0 : i32
    %c0_i32_1 = arith.constant 0 : i32
    return %c0_i32, %c0_i32_0 : i32, i32
  }
  func.func @transform_4(%arg0: i32) -> (i32, i32) {
    %c0_i32 = arith.constant 0 : i32
    %c0_i32_0 = arith.constant 0 : i32
    %c0_i32_1 = arith.constant 0 : i32
    return %c0_i32, %c0_i32_0 : i32, i32
  }
  func.func @transform_5(%arg0: i32) -> (i32, i32) {
    %c0_i32 = arith.constant 0 : i32
    %c0_i32_0 = arith.constant 0 : i32
    return %arg0, %c0_i32 : i32, i32
  }
  func.func @transform_6(%arg0: i32) -> (i32, i32) {
    %c0_i32 = arith.constant 0 : i32
    %c0_i32_0 = arith.constant 0 : i32
    return %arg0, %c0_i32 : i32, i32
  }
}

</mosaic_0001>

<llo_original>
// kernel: tpu_custom_call.1
$region0: #{tpu_custom_call.1}
  #allocation0 [shape = 'u32[]', space=smem, size = 0x4, offset = 0x4, fixed_abs, tag = 'smem constant byte address 0x4 - core index']
  #allocation1 [shape = 'u32[144,128]{1,0:T(1,128)}', space=vmem, size = 0x12000, scoped, tag = 'internal scratch']
  %s0 = inlined_call_operand.vmem [shape: f32[8,29], index: 0, kind: input, shape index: {}]
  %s1 = inlined_call_operand.vmem [shape: bf16[29,128], index: 1, kind: input, shape index: {}]
  %s2 = inlined_call_operand.hbm [shape: bf16[768,128], index: 2, kind: input, shape index: {}]
  %s3 = inlined_call_operand.vmem [shape: bf16[128,16], index: 3, kind: input, shape index: {}]
  %s4 = inlined_call_operand.vmem [shape: f32[16,128], index: 4, kind: input, shape index: {}]
  %s5 = inlined_call_operand.hbm [shape: f32[8,15], index: 5, kind: output, shape index: {0}]
  %s6 = inlined_call_operand.hbm [shape: f32[8,128], index: 6, kind: output, shape index: {1}]
  %7 = xla_tuple %s5, %s6
  %s8 = sld [smem:[#allocation0]]
  $region42: #{tpu_custom_call.1} parent=0
    _
  %s10 = ssub.s32 1, %s8
  %s11 = scalar_select 0, %s10, %s8
  $region1: #{tpu_custom_call.1} parent=0
    #allocation2 [shape = 'u8[196608]{0}', space=vmem, size = 0x30000, scoped, tag = 'input window, operand 2, single buffered']
    #allocation3 [shape = 's32[1]{0}', space=sflag, size = 0x4, scoped, tag = 'scoped memory for tpu_custom_call.1']
    #allocation4 [shape = 's32[1]{0}', space=sflag, size = 0x4, scoped, tag = 'scoped memory for tpu_custom_call.1']
    #allocation5 [shape = 'u8[4096]{0}', space=vmem, size = 0x1000, scoped, tag = 'output window, operand 0, single buffered']
    #allocation6 [shape = 'u8[4096]{0}', space=vmem, size = 0x1000, scoped, tag = 'output window, operand 1, single buffered']
    #allocation7 [shape = 's32[1]{0}', space=sflag, size = 0x4, scoped, tag = 'scoped memory for tpu_custom_call.1']
    %12 = vsyncpa [#allocation3], 0
    %13 = vsyncpa [#allocation4], 0
    %14 = vsyncpa [#allocation7], 0
    // Predicated region
    $region2: #{tpu_custom_call.1} parent=1 // pred_check
      _
    $region3: #{tpu_custom_call.1} parent=1 // pred_check_branch
      %16 = sbr.rel (0) target = $region5
    $region4: #{tpu_custom_call.1} parent=1 // pred_region
      _
    $region5: #{tpu_custom_call.1} parent=1 // pred_fallthru
      _
    // Predicated region
    $region6: #{tpu_custom_call.1} parent=1 // pred_check
      _
    $region7: #{tpu_custom_call.1} parent=1 // pred_check_branch
      %18 = sbr.rel (0) target = $region9
    $region8: #{tpu_custom_call.1} parent=1 // pred_region
      _
    $region9: #{tpu_custom_call.1} parent=1 // pred_fallthru
      _
    // Predicated region
    $region10: #{tpu_custom_call.1} parent=1 // pred_check
      _
    $region11: #{tpu_custom_call.1} parent=1 // pred_check_branch
      %20 = sbr.rel (0) target = $region13
    $region12: #{tpu_custom_call.1} parent=1 // pred_region
      %s22 = ssub.s32 6144, 6144
      %23 = vsyncadd [#allocation3], %s22
      %s24 = sshll.u32 [#allocation2], 4
      %s25 = int_to_ptr.vmem [resolvable:$true] %s24
      %30 = dma.hbm_to_vmem [thread:$0]  %s2, 6144, %s25, [#allocation3], 64, 64, 4
    $region13: #{tpu_custom_call.1} parent=1 // pred_fallthru
      _
    // Predicated region
    $region14: #{tpu_custom_call.1} parent=1 // pred_check
      _
    $region15: #{tpu_custom_call.1} parent=1 // pred_check_branch
      %32 = sbr.rel (0) target = $region17
    $region16: #{tpu_custom_call.1} parent=1 // pred_region
      _
    $region17: #{tpu_custom_call.1} parent=1 // pred_fallthru
      _
    // Predicated region
    $region18: #{tpu_custom_call.1} parent=1 // pred_check
      _
    $region19: #{tpu_custom_call.1} parent=1 // pred_check_branch
      %34 = sbr.rel (0) target = $region21
    $region20: #{tpu_custom_call.1} parent=1 // pred_region
      _
    $region21: #{tpu_custom_call.1} parent=1 // pred_fallthru
      _
    // Predicated region
    $region22: #{tpu_custom_call.1} parent=1 // pred_check
      _
    $region23: #{tpu_custom_call.1} parent=1 // pred_check_branch
      %36 = sbr.rel (0) target = $region25
    $region24: #{tpu_custom_call.1} parent=1 // pred_region
      %37 = dma.done [#allocation3], 6144
    $region25: #{tpu_custom_call.1} parent=1 // pred_fallthru
      _
    %v39 = vld [vmem:[%s0] sm:$0xff]
    %v40 = vld [vmem:[%s1] sm:$0xf]
    %v41 = vld [vmem:[%s1 + $0x4] sm:$0xf]
    %v42 = vld [vmem:[%s1 + $0x8] sm:$0xf]
    %v43 = vld [vmem:[%s1 + $0xc] sm:$0x7]
    %v44 = vpack.c.bf16 %v39, %v39
    %v45 = vld [vmem:[%s4] sm:$0x1]
    %v46 = vlaneseq
    %v47 = vshrl.u32 %v46, 7
    %v48 = vsub.s32 0, %v47
    %v49 = vrot.slane %v45, %v48
    %v54 = vunpack.c.l.b16 %v40
    %v55 = vunpack.c.l.b16 %v41
    %v56 = vunpack.c.l.b16 %v42
    %v57 = vunpack.c.l.b16 %v43
    %v58 = vpack.c.b16 %v55, %v54
    %v59 = vpack.c.b16 %v57, %v56
    %vm61 = vcmask 236544
    %v63 = vsel %vm61, %v44, 0
    %vm65 = vcmask 1045504
    %vm66 = vcmask 1046528
    %v67 = vsel %vm65, 4294967295, 65535
    %v68 = vsel %vm66, %v67, 0
    %v70 = vand.u32 %v59, %v68
    %72 = vmatprep.subr.bf16.mxu0 0
    %73 = vmatpush1.bf16.msra.mxu0 0
    %74 = vmatprep.subr.bf16.mxu0 0
    %75 = vmatpush1.bf16.msra.mxu0 0
    %76 = vmatprep.subr.bf16.mxu0 0
    %77 = vmatpush1.bf16.msra.mxu0 0
    %78 = vmatprep.subr.bf16.mxu0 0
    %79 = vmatpush1.bf16.msra.mxu0 0
    %80 = vmatprep.subr.bf16.mxu0 0
    %81 = vmatpush1.bf16.msra.mxu0 0
    %82 = vmatprep.subr.bf16.mxu0 0
    %83 = vmatpush1.bf16.msra.mxu0 0
    %84 = vmatprep.subr.bf16.mxu0 0
    %85 = vmatpush1.bf16.msra.mxu0 %v70
    %86 = vmatprep.subr.bf16.mxu0 0
    %87 = vmatpush1.bf16.msra.mxu0 %v58
    %88 = vmatprep.subr.bf16.mxu0 0
    %89 = vmatpush2.bf16.msra.mxu0 0
    %90 = vmatprep.subr.bf16.mxu0 0
    %91 = vmatpush2.bf16.msra.mxu0 0
    %92 = vmatprep.subr.bf16.mxu0 0
    %93 = vmatpush2.bf16.msra.mxu0 0
    %94 = vmatprep.subr.bf16.mxu0 0
    %95 = vmatpush2.bf16.msra.mxu0 0
    %96 = vmatprep.subr.bf16.mxu0 0
    %97 = vmatpush2.bf16.msra.mxu0 0
    %98 = vmatprep.subr.bf16.mxu0 0
    %99 = vmatpush2.bf16.msra.mxu0 0
    %100 = vmatprep.subr.bf16.mxu0 0
    %101 = vmatpush2.bf16.msra.mxu0 0
    %102 = vmatprep.subr.bf16.mxu0 0
    %103 = vmatpush2.bf16.msra.mxu0 0
    %104 = vmatprep.mubr.bf16.mxu0 0
    %105 = vmatmul.mubr.bf16.gmra.mxu0 %v63
    %v106 = vpop.f32.mrf.mxu0
    %v107 = vadd.f32 %v49, %v106
    %v108 = vpop.f32.mrf.mxu0
    %v109 = vpop.f32.mrf.mxu0
    %v110 = vpop.f32.mrf.mxu0
    %111 = vdwg.mxu0
    %v112 = vmax.f32 %v107, 0.0
    %v113 = vld [vmem:[#allocation2] sm:$0xf]
    %v114 = vld [vmem:[#allocation2 + $0x4] sm:$0xf]
    %v115 = vld [vmem:[#allocation2 + $0x8] sm:$0xf]
    %v116 = vld [vmem:[#allocation2 + $0xc] sm:$0xf]
    %v117 = vld [vmem:[#allocation2 + $0x10] sm:$0xf]
    %v118 = vld [vmem:[#allocation2 + $0x14] sm:$0xf]
    %v119 = vld [vmem:[#allocation2 + $0x18] sm:$0xf]
    %v120 = vld [vmem:[#allocation2 + $0x1c] sm:$0xf]
    %v121 = vld [vmem:[#allocation2 + $0x20] sm:$0xf]
    %v122 = vld [vmem:[#allocation2 + $0x24] sm:$0xf]
    %v123 = vld [vmem:[#allocation2 + $0x28] sm:$0xf]
    %v124 = vld [vmem:[#allocation2 + $0x2c] sm:$0xf]
    %v125 = vld [vmem:[#allocation2 + $0x30] sm:$0xf]
    %v126 = vld [vmem:[#allocation2 + $0x34] sm:$0xf]
    %v127 = vld [vmem:[#allocation2 + $0x38] sm:$0xf]
    %v128 = vld [vmem:[#allocation2 + $0x3c] sm:$0xf]
    %v129 = vpack.c.bf16 %v112, %v112
    %v130 = vld [vmem:[%s4 + $0x1] sm:$0x1]
    %v131 = vlaneseq
    %v132 = vshrl.u32 %v131, 7
    %v133 = vsub.s32 0, %v132
    %v134 = vrot.slane %v130, %v133
    %v151 = vunpack.c.l.b16 %v113
    %v152 = vunpack.c.l.b16 %v114
    %v153 = vunpack.c.l.b16 %v115
    %v154 = vunpack.c.l.b16 %v116
    %v155 = vunpack.c.l.b16 %v117
    %v156 = vunpack.c.l.b16 %v118
    %v157 = vunpack.c.l.b16 %v119
    %v158 = vunpack.c.l.b16 %v120
    %v159 = vunpack.c.l.b16 %v121
    %v160 = vunpack.c.l.b16 %v122
    %v161 = vunpack.c.l.b16 %v123
    %v162 = vunpack.c.l.b16 %v124
    %v163 = vunpack.c.l.b16 %v125
    %v164 = vunpack.c.l.b16 %v126
    %v165 = vunpack.c.l.b16 %v127
    %v166 = vunpack.c.l.b16 %v128
    %v167 = vpack.c.b16 %v152, %v151
    %v168 = vpack.c.b16 %v154, %v153
    %v169 = vpack.c.b16 %v156, %v155
    %v170 = vpack.c.b16 %v158, %v157
    %v171 = vpack.c.b16 %v160, %v159
    %v172 = vpack.c.b16 %v162, %v161
    %v173 = vpack.c.b16 %v164, %v163
    %v174 = vpack.c.b16 %v166, %v165
    %183 = vmatprep.subr.bf16.mxu0 0
    %184 = vmatpush1.bf16.msra.mxu0 %v174
    %185 = vmatprep.subr.bf16.mxu0 0
    %186 = vmatpush1.bf16.msra.mxu0 %v173
    %187 = vmatprep.subr.bf16.mxu0 0
    %188 = vmatpush1.bf16.msra.mxu0 %v172
    %189 = vmatprep.subr.bf16.mxu0 0
    %190 = vmatpush1.bf16.msra.mxu0 %v171
    %191 = vmatprep.subr.bf16.mxu0 0
    %192 = vmatpush1.bf16.msra.mxu0 %v170
    %193 = vmatprep.subr.bf16.mxu0 0
    %194 = vmatpush1.bf16.msra.mxu0 %v169
    %195 = vmatprep.subr.bf16.mxu0 0
    %196 = vmatpush1.bf16.msra.mxu0 %v168
    %197 = vmatprep.subr.bf16.mxu0 0
    %198 = vmatpush1.bf16.msra.mxu0 %v167
    %199 = vmatprep.subr.bf16.mxu0 0
    %200 = vmatpush2.bf16.msra.mxu0 0
    %201 = vmatprep.subr.bf16.mxu0 0
    %202 = vmatpush2.bf16.msra.mxu0 0
    %203 = vmatprep.subr.bf16.mxu0 0
    %204 = vmatpush2.bf16.msra.mxu0 0
    %205 = vmatprep.subr.bf16.mxu0 0
    %206 = vmatpush2.bf16.msra.mxu0 0
    %207 = vmatprep.subr.bf16.mxu0 0
    %208 = vmatpush2.bf16.msra.mxu0 0
    %209 = vmatprep.subr.bf16.mxu0 0
    %210 = vmatpush2.bf16.msra.mxu0 0
    %211 = vmatprep.subr.bf16.mxu0 0
    %212 = vmatpush2.bf16.msra.mxu0 0
    %213 = vmatprep.subr.bf16.mxu0 0
    %214 = vmatpush2.bf16.msra.mxu0 0
    %215 = vmatprep.mubr.bf16.mxu0 0
    %216 = vmatmul.mubr.bf16.gmra.mxu0 %v129
    %v217 = vpop.f32.mrf.mxu0
    %v218 = vadd.f32 %v134, %v217
    %v219 = vpop.f32.mrf.mxu0
    %v220 = vpop.f32.mrf.mxu0
    %v221 = vpop.f32.mrf.mxu0
    %222 = vdwg.mxu0
    %v223 = vmax.f32 %v218, 0.0
    %v224 = vld [vmem:[#allocation2 + $0x40] sm:$0xf]
    %v225 = vld [vmem:[#allocation2 + $0x44] sm:$0xf]
    %v226 = vld [vmem:[#allocation2 + $0x48] sm:$0xf]
    %v227 = vld [vmem:[#allocation2 + $0x4c] sm:$0xf]
    %v228 = vld [vmem:[#allocation2 + $0x50] sm:$0xf]
    %v229 = vld [vmem:[#allocation2 + $0x54] sm:$0xf]
    %v230 = vld [vmem:[#allocation2 + $0x58] sm:$0xf]
    %v231 = vld [vmem:[#allocation2 + $0x5c] sm:$0xf]
    %v232 = vld [vmem:[#allocation2 + $0x60] sm:$0xf]
    %v233 = vld [vmem:[#allocation2 + $0x64] sm:$0xf]
    %v234 = vld [vmem:[#allocation2 + $0x68] sm:$0xf]
    %v235 = vld [vmem:[#allocation2 + $0x6c] sm:$0xf]
    %v236 = vld [vmem:[#allocation2 + $0x70] sm:$0xf]
    %v237 = vld [vmem:[#allocation2 + $0x74] sm:$0xf]
    %v238 = vld [vmem:[#allocation2 + $0x78] sm:$0xf]
    %v239 = vld [vmem:[#allocation2 + $0x7c] sm:$0xf]
    %v240 = vpack.c.bf16 %v223, %v223
    %v241 = vld [vmem:[%s4 + $0x2] sm:$0x1]
    %v242 = vlaneseq
    %v243 = vshrl.u32 %v242, 7
    %v244 = vsub.s32 0, %v243
    %v245 = vrot.slane %v241, %v244
    %v262 = vunpack.c.l.b16 %v224
    %v263 = vunpack.c.l.b16 %v225
    %v264 = vunpack.c.l.b16 %v226
    %v265 = vunpack.c.l.b16 %v227
    %v266 = vunpack.c.l.b16 %v228
    %v267 = vunpack.c.l.b16 %v229
    %v268 = vunpack.c.l.b16 %v230
    %v269 = vunpack.c.l.b16 %v231
    %v270 = vunpack.c.l.b16 %v232
    %v271 = vunpack.c.l.b16 %v233
    %v272 = vunpack.c.l.b16 %v234
    %v273 = vunpack.c.l.b16 %v235
    %v274 = vunpack.c.l.b16 %v236
    %v275 = vunpack.c.l.b16 %v237
    %v276 = vunpack.c.l.b16 %v238
    %v277 = vunpack.c.l.b16 %v239
    %v278 = vpack.c.b16 %v263, %v262
    %v279 = vpack.c.b16 %v265, %v264
    %v280 = vpack.c.b16 %v267, %v266
    %v281 = vpack.c.b16 %v269, %v268
    %v282 = vpack.c.b16 %v271, %v270
    %v283 = vpack.c.b16 %v273, %v272
    %v284 = vpack.c.b16 %v275, %v274
    %v285 = vpack.c.b16 %v277, %v276
    %294 = vmatprep.subr.bf16.mxu0 0
    %295 = vmatpush1.bf16.msra.mxu0 %v285
    %296 = vmatprep.subr.bf16.mxu0 0
    %297 = vmatpush1.bf16.msra.mxu0 %v284
    %298 = vmatprep.subr.bf16.mxu0 0
    %299 = vmatpush1.bf16.msra.mxu0 %v283
    %300 = vmatprep.subr.bf16.mxu0 0
    %301 = vmatpush1.bf16.msra.mxu0 %v282
    %302 = vmatprep.subr.bf16.mxu0 0
    %303 = vmatpush1.bf16.msra.mxu0 %v281
    %304 = vmatprep.subr.bf16.mxu0 0
    %305 = vmatpush1.bf16.msra.mxu0 %v280
    %306 = vmatprep.subr.bf16.mxu0 0
    %307 = vmatpush1.bf16.msra.mxu0 %v279
    %308 = vmatprep.subr.bf16.mxu0 0
    %309 = vmatpush1.bf16.msra.mxu0 %v278
    %310 = vmatprep.subr.bf16.mxu0 0
    %311 = vmatpush2.bf16.msra.mxu0 0
    %312 = vmatprep.subr.bf16.mxu0 0
    %313 = vmatpush2.bf16.msra.mxu0 0
    %314 = vmatprep.subr.bf16.mxu0 0
    %315 = vmatpush2.bf16.msra.mxu0 0
    %316 = vmatprep.subr.bf16.mxu0 0
    %317 = vmatpush2.bf16.msra.mxu0 0
    %318 = vmatprep.subr.bf16.mxu0 0
    %319 = vmatpush2.bf16.msra.mxu0 0
    %320 = vmatprep.subr.bf16.mxu0 0
    %321 = vmatpush2.bf16.msra.mxu0 0
    %322 = vmatprep.subr.bf16.mxu0 0
    %323 = vmatpush2.bf16.msra.mxu0 0
    %324 = vmatprep.subr.bf16.mxu0 0
    %325 = vmatpush2.bf16.msra.mxu0 0
    %326 = vmatprep.mubr.bf16.mxu0 0
    %327 = vmatmul.mubr.bf16.gmra.mxu0 %v240
    %v328 = vpop.f32.mrf.mxu0
    %v329 = vadd.f32 %v245, %v328
    %v330 = vpop.f32.mrf.mxu0
    %v331 = vpop.f32.mrf.mxu0
    %v332 = vpop.f32.mrf.mxu0
    %333 = vdwg.mxu0
    %v334 = vld [vmem:[%s4 + $0x3] sm:$0x1]
    %v335 = vld [vmem:[%s4 + $0x4] sm:$0x1]
    %336 = vadd.xlane.f32.xlu0 %v329
    %v337 = vpop.xlane.xlu0 %336
    %v338 = vrcp.pop 128.0
    %v339 = vmul.f32 %v337, %v338
    %v340 = vmul.f32 %v329, %v329
    %341 = vadd.xlane.f32.xlu0 %v340
    %v342 = vpop.xlane.xlu0 %341
    %v343 = vmul.f32 %v342, %v338
    %v344 = vmul.f32 %v339, %v339
    %v345 = vsub.f32 %v343, %v344
    %v346 = vsub.f32 %v329, %v339
    %v347 = vadd.f32 %v345, 1e-05
    %v348 = vrsqrt.pop %v347
    %v349 = vmul.f32 %v346, %v348
    %v350 = vlaneseq
    %v351 = vshrl.u32 %v350, 7
    %v352 = vsub.s32 0, %v351
    %v353 = vrot.slane %v334, %v352
    %v354 = vmul.f32 %v349, %v353
    %v355 = vlaneseq
    %v356 = vshrl.u32 %v355, 7
    %v357 = vsub.s32 0, %v356
    %v358 = vrot.slane %v335, %v357
    %v359 = vadd.f32 %v354, %v358
    %v360 = vld [vmem:[#allocation2 + $0x80] sm:$0xf]
    %v361 = vld [vmem:[#allocation2 + $0x84] sm:$0xf]
    %v362 = vld [vmem:[#allocation2 + $0x88] sm:$0xf]
    %v363 = vld [vmem:[#allocation2 + $0x8c] sm:$0xf]
    %v364 = vld [vmem:[#allocation2 + $0x90] sm:$0xf]
    %v365 = vld [vmem:[#allocation2 + $0x94] sm:$0xf]
    %v366 = vld [vmem:[#allocation2 + $0x98] sm:$0xf]
    %v367 = vld [vmem:[#allocation2 + $0x9c] sm:$0xf]
    %v368 = vld [vmem:[#allocation2 + $0xa0] sm:$0xf]
    %v369 = vld [vmem:[#allocation2 + $0xa4] sm:$0xf]
    %v370 = vld [vmem:[#allocation2 + $0xa8] sm:$0xf]
    %v371 = vld [vmem:[#allocation2 + $0xac] sm:$0xf]
    %v372 = vld [vmem:[#allocation2 + $0xb0] sm:$0xf]
    %v373 = vld [vmem:[#allocation2 + $0xb4] sm:$0xf]
    %v374 = vld [vmem:[#allocation2 + $0xb8] sm:$0xf]
    %v375 = vld [vmem:[#allocation2 + $0xbc] sm:$0xf]
    %v376 = vpack.c.bf16 %v359, %v359
    %v377 = vld [vmem:[%s4 + $0x5] sm:$0x1]
    %v378 = vlaneseq
    %v379 = vshrl.u32 %v378, 7
    %v380 = vsub.s32 0, %v379
    %v381 = vrot.slane %v377, %v380
    %v398 = vunpack.c.l.b16 %v360
    %v399 = vunpack.c.l.b16 %v361
    %v400 = vunpack.c.l.b16 %v362
    %v401 = vunpack.c.l.b16 %v363
    %v402 = vunpack.c.l.b16 %v364
    %v403 = vunpack.c.l.b16 %v365
    %v404 = vunpack.c.l.b16 %v366
    %v405 = vunpack.c.l.b16 %v367
    %v406 = vunpack.c.l.b16 %v368
    %v407 = vunpack.c.l.b16 %v369
    %v408 = vunpack.c.l.b16 %v370
    %v409 = vunpack.c.l.b16 %v371
    %v410 = vunpack.c.l.b16 %v372
    %v411 = vunpack.c.l.b16 %v373
    %v412 = vunpack.c.l.b16 %v374
    %v413 = vunpack.c.l.b16 %v375
    %v414 = vpack.c.b16 %v399, %v398
    %v415 = vpack.c.b16 %v401, %v400
    %v416 = vpack.c.b16 %v403, %v402
    %v417 = vpack.c.b16 %v405, %v404
    %v418 = vpack.c.b16 %v407, %v406
    %v419 = vpack.c.b16 %v409, %v408
    %v420 = vpack.c.b16 %v411, %v410
    %v421 = vpack.c.b16 %v413, %v412
    %430 = vmatprep.subr.bf16.mxu0 0
    %431 = vmatpush1.bf16.msra.mxu0 %v421
    %432 = vmatprep.subr.bf16.mxu0 0
    %433 = vmatpush1.bf16.msra.mxu0 %v420
    %434 = vmatprep.subr.bf16.mxu0 0
    %435 = vmatpush1.bf16.msra.mxu0 %v419
    %436 = vmatprep.subr.bf16.mxu0 0
    %437 = vmatpush1.bf16.msra.mxu0 %v418
    %438 = vmatprep.subr.bf16.mxu0 0
    %439 = vmatpush1.bf16.msra.mxu0 %v417
    %440 = vmatprep.subr.bf16.mxu0 0
    %441 = vmatpush1.bf16.msra.mxu0 %v416
    %442 = vmatprep.subr.bf16.mxu0 0
    %443 = vmatpush1.bf16.msra.mxu0 %v415
    %444 = vmatprep.subr.bf16.mxu0 0
    %445 = vmatpush1.bf16.msra.mxu0 %v414
    %446 = vmatprep.subr.bf16.mxu0 0
    %447 = vmatpush2.bf16.msra.mxu0 0
    %448 = vmatprep.subr.bf16.mxu0 0
    %449 = vmatpush2.bf16.msra.mxu0 0
    %450 = vmatprep.subr.bf16.mxu0 0
    %451 = vmatpush2.bf16.msra.mxu0 0
    %452 = vmatprep.subr.bf16.mxu0 0
    %453 = vmatpush2.bf16.msra.mxu0 0
    %454 = vmatprep.subr.bf16.mxu0 0
    %455 = vmatpush2.bf16.msra.mxu0 0
    %456 = vmatprep.subr.bf16.mxu0 0
    %457 = vmatpush2.bf16.msra.mxu0 0
    %458 = vmatprep.subr.bf16.mxu0 0
    %459 = vmatpush2.bf16.msra.mxu0 0
    %460 = vmatprep.subr.bf16.mxu0 0
    %461 = vmatpush2.bf16.msra.mxu0 0
    %462 = vmatprep.mubr.bf16.mxu0 0
    %463 = vmatmul.mubr.bf16.gmra.mxu0 %v376
    %v464 = vpop.f32.mrf.mxu0
    %v465 = vadd.f32 %v381, %v464
    %v466 = vpop.f32.mrf.mxu0
    %v467 = vpop.f32.mrf.mxu0
    %v468 = vpop.f32.mrf.mxu0
    %469 = vdwg.mxu0
    %v470 = vadd.f32 %v359, %v465
    %v471 = vld [vmem:[%s4 + $0x6] sm:$0x1]
    %v472 = vld [vmem:[%s4 + $0x7] sm:$0x1]
    %473 = vadd.xlane.f32.xlu0 %v470
    %v474 = vpop.xlane.xlu0 %473
    %v475 = vmul.f32 %v474, %v338
    %v476 = vmul.f32 %v470, %v470
    %477 = vadd.xlane.f32.xlu0 %v476
    %v478 = vpop.xlane.xlu0 %477
    %v479 = vmul.f32 %v478, %v338
    %v480 = vmul.f32 %v475, %v475
    %v481 = vsub.f32 %v479, %v480
    %v482 = vsub.f32 %v470, %v475
    %v483 = vadd.f32 %v481, 1e-05
    %v484 = vrsqrt.pop %v483
    %v485 = vmul.f32 %v482, %v484
    %v486 = vlaneseq
    %v487 = vshrl.u32 %v486, 7
    %v488 = vsub.s32 0, %v487
    %v489 = vrot.slane %v471, %v488
    %v490 = vmul.f32 %v485, %v489
    %v491 = vlaneseq
    %v492 = vshrl.u32 %v491, 7
    %v493 = vsub.s32 0, %v492
    %v494 = vrot.slane %v472, %v493
    %v495 = vadd.f32 %v490, %v494
    %v496 = vld [vmem:[#allocation2 + $0xc0] sm:$0xf]
    %v497 = vld [vmem:[#allocation2 + $0xc4] sm:$0xf]
    %v498 = vld [vmem:[#allocation2 + $0xc8] sm:$0xf]
    %v499 = vld [vmem:[#allocation2 + $0xcc] sm:$0xf]
    %v500 = vld [vmem:[#allocation2 + $0xd0] sm:$0xf]
    %v501 = vld [vmem:[#allocation2 + $0xd4] sm:$0xf]
    %v502 = vld [vmem:[#allocation2 + $0xd8] sm:$0xf]
    %v503 = vld [vmem:[#allocation2 + $0xdc] sm:$0xf]
    %v504 = vld [vmem:[#allocation2 + $0xe0] sm:$0xf]
    %v505 = vld [vmem:[#allocation2 + $0xe4] sm:$0xf]
    %v506 = vld [vmem:[#allocation2 + $0xe8] sm:$0xf]
    %v507 = vld [vmem:[#allocation2 + $0xec] sm:$0xf]
    %v508 = vld [vmem:[#allocation2 + $0xf0] sm:$0xf]
    %v509 = vld [vmem:[#allocation2 + $0xf4] sm:$0xf]
    %v510 = vld [vmem:[#allocation2 + $0xf8] sm:$0xf]
    %v511 = vld [vmem:[#allocation2 + $0xfc] sm:$0xf]
    %v512 = vpack.c.bf16 %v495, %v495
    %v513 = vld [vmem:[%s4 + $0x8] sm:$0x1]
    %v514 = vlaneseq
    %v515 = vshrl.u32 %v514, 7
    %v516 = vsub.s32 0, %v515
    %v517 = vrot.slane %v513, %v516
    %v534 = vunpack.c.l.b16 %v496
    %v535 = vunpack.c.l.b16 %v497
    %v536 = vunpack.c.l.b16 %v498
    %v537 = vunpack.c.l.b16 %v499
    %v538 = vunpack.c.l.b16 %v500
    %v539 = vunpack.c.l.b16 %v501
    %v540 = vunpack.c.l.b16 %v502
    %v541 = vunpack.c.l.b16 %v503
    %v542 = vunpack.c.l.b16 %v504
    %v543 = vunpack.c.l.b16 %v505
    %v544 = vunpack.c.l.b16 %v506
    %v545 = vunpack.c.l.b16 %v507
    %v546 = vunpack.c.l.b16 %v508
    %v547 = vunpack.c.l.b16 %v509
    %v548 = vunpack.c.l.b16 %v510
    %v549 = vunpack.c.l.b16 %v511
    %v550 = vpack.c.b16 %v535, %v534
    %v551 = vpack.c.b16 %v537, %v536
    %v552 = vpack.c.b16 %v539, %v538
    %v553 = vpack.c.b16 %v541, %v540
    %v554 = vpack.c.b16 %v543, %v542
    %v555 = vpack.c.b16 %v545, %v544
    %v556 = vpack.c.b16 %v547, %v546
    %v557 = vpack.c.b16 %v549, %v548
    %566 = vmatprep.subr.bf16.mxu0 0
    %567 = vmatpush1.bf16.msra.mxu0 %v557
    %568 = vmatprep.subr.bf16.mxu0 0
    %569 = vmatpush1.bf16.msra.mxu0 %v556
    %570 = vmatprep.subr.bf16.mxu0 0
    %571 = vmatpush1.bf16.msra.mxu0 %v555
    %572 = vmatprep.subr.bf16.mxu0 0
    %573 = vmatpush1.bf16.msra.mxu0 %v554
    %574 = vmatprep.subr.bf16.mxu0 0
    %575 = vmatpush1.bf16.msra.mxu0 %v553
    %576 = vmatprep.subr.bf16.mxu0 0
    %577 = vmatpush1.bf16.msra.mxu0 %v552
    %578 = vmatprep.subr.bf16.mxu0 0
    %579 = vmatpush1.bf16.msra.mxu0 %v551
    %580 = vmatprep.subr.bf16.mxu0 0
    %581 = vmatpush1.bf16.msra.mxu0 %v550
    %582 = vmatprep.subr.bf16.mxu0 0
    %583 = vmatpush2.bf16.msra.mxu0 0
    %584 = vmatprep.subr.bf16.mxu0 0
    %585 = vmatpush2.bf16.msra.mxu0 0
    %586 = vmatprep.subr.bf16.mxu0 0
    %587 = vmatpush2.bf16.msra.mxu0 0
    %588 = vmatprep.subr.bf16.mxu0 0
    %589 = vmatpush2.bf16.msra.mxu0 0
    %590 = vmatprep.subr.bf16.mxu0 0
    %591 = vmatpush2.bf16.msra.mxu0 0
    %592 = vmatprep.subr.bf16.mxu0 0
    %593 = vmatpush2.bf16.msra.mxu0 0
    %594 = vmatprep.subr.bf16.mxu0 0
    %595 = vmatpush2.bf16.msra.mxu0 0
    %596 = vmatprep.subr.bf16.mxu0 0
    %597 = vmatpush2.bf16.msra.mxu0 0
    %598 = vmatprep.mubr.bf16.mxu0 0
    %599 = vmatmul.mubr.bf16.gmra.mxu0 %v512
    %v600 = vpop.f32.mrf.mxu0
    %v601 = vadd.f32 %v517, %v600
    %v602 = vpop.f32.mrf.mxu0
    %v603 = vpop.f32.mrf.mxu0
    %v604 = vpop.f32.mrf.mxu0
    %605 = vdwg.mxu0
    %v606 = vmax.f32 %v601, 0.0
    %v607 = vld [vmem:[#allocation2 + $0x100] sm:$0xf]
    %v608 = vld [vmem:[#allocation2 + $0x104] sm:$0xf]
    %v609 = vld [vmem:[#allocation2 + $0x108] sm:$0xf]
    %v610 = vld [vmem:[#allocation2 + $0x10c] sm:$0xf]
    %v611 = vld [vmem:[#allocation2 + $0x110] sm:$0xf]
    %v612 = vld [vmem:[#allocation2 + $0x114] sm:$0xf]
    %v613 = vld [vmem:[#allocation2 + $0x118] sm:$0xf]
    %v614 = vld [vmem:[#allocation2 + $0x11c] sm:$0xf]
    %v615 = vld [vmem:[#allocation2 + $0x120] sm:$0xf]
    %v616 = vld [vmem:[#allocation2 + $0x124] sm:$0xf]
    %v617 = vld [vmem:[#allocation2 + $0x128] sm:$0xf]
    %v618 = vld [vmem:[#allocation2 + $0x12c] sm:$0xf]
    %v619 = vld [vmem:[#allocation2 + $0x130] sm:$0xf]
    %v620 = vld [vmem:[#allocation2 + $0x134] sm:$0xf]
    %v621 = vld [vmem:[#allocation2 + $0x138] sm:$0xf]
    %v622 = vld [vmem:[#allocation2 + $0x13c] sm:$0xf]
    %v623 = vpack.c.bf16 %v606, %v606
    %v624 = vld [vmem:[%s4 + $0x9] sm:$0x1]
    %v625 = vlaneseq
    %v626 = vshrl.u32 %v625, 7
    %v627 = vsub.s32 0, %v626
    %v628 = vrot.slane %v624, %v627
    %v645 = vunpack.c.l.b16 %v607
    %v646 = vunpack.c.l.b16 %v608
    %v647 = vunpack.c.l.b16 %v609
    %v648 = vunpack.c.l.b16 %v610
    %v649 = vunpack.c.l.b16 %v611
    %v650 = vunpack.c.l.b16 %v612
    %v651 = vunpack.c.l.b16 %v613
    %v652 = vunpack.c.l.b16 %v614
    %v653 = vunpack.c.l.b16 %v615
    %v654 = vunpack.c.l.b16 %v616
    %v655 = vunpack.c.l.b16 %v617
    %v656 = vunpack.c.l.b16 %v618
    %v657 = vunpack.c.l.b16 %v619
    %v658 = vunpack.c.l.b16 %v620
    %v659 = vunpack.c.l.b16 %v621
    %v660 = vunpack.c.l.b16 %v622
    %v661 = vpack.c.b16 %v646, %v645
    %v662 = vpack.c.b16 %v648, %v647
    %v663 = vpack.c.b16 %v650, %v649
    %v664 = vpack.c.b16 %v652, %v651
    %v665 = vpack.c.b16 %v654, %v653
    %v666 = vpack.c.b16 %v656, %v655
    %v667 = vpack.c.b16 %v658, %v657
    %v668 = vpack.c.b16 %v660, %v659
    %677 = vmatprep.subr.bf16.mxu0 0
    %678 = vmatpush1.bf16.msra.mxu0 %v668
    %679 = vmatprep.subr.bf16.mxu0 0
    %680 = vmatpush1.bf16.msra.mxu0 %v667
    %681 = vmatprep.subr.bf16.mxu0 0
    %682 = vmatpush1.bf16.msra.mxu0 %v666
    %683 = vmatprep.subr.bf16.mxu0 0
    %684 = vmatpush1.bf16.msra.mxu0 %v665
    %685 = vmatprep.subr.bf16.mxu0 0
    %686 = vmatpush1.bf16.msra.mxu0 %v664
    %687 = vmatprep.subr.bf16.mxu0 0
    %688 = vmatpush1.bf16.msra.mxu0 %v663
    %689 = vmatprep.subr.bf16.mxu0 0
    %690 = vmatpush1.bf16.msra.mxu0 %v662
    %691 = vmatprep.subr.bf16.mxu0 0
    %692 = vmatpush1.bf16.msra.mxu0 %v661
    %693 = vmatprep.subr.bf16.mxu0 0
    %694 = vmatpush2.bf16.msra.mxu0 0
    %695 = vmatprep.subr.bf16.mxu0 0
    %696 = vmatpush2.bf16.msra.mxu0 0
    %697 = vmatprep.subr.bf16.mxu0 0
    %698 = vmatpush2.bf16.msra.mxu0 0
    %699 = vmatprep.subr.bf16.mxu0 0
    %700 = vmatpush2.bf16.msra.mxu0 0
    %701 = vmatprep.subr.bf16.mxu0 0
    %702 = vmatpush2.bf16.msra.mxu0 0
    %703 = vmatprep.subr.bf16.mxu0 0
    %704 = vmatpush2.bf16.msra.mxu0 0
    %705 = vmatprep.subr.bf16.mxu0 0
    %706 = vmatpush2.bf16.msra.mxu0 0
    %707 = vmatprep.subr.bf16.mxu0 0
    %708 = vmatpush2.bf16.msra.mxu0 0
    %709 = vmatprep.mubr.bf16.mxu0 0
    %710 = vmatmul.mubr.bf16.gmra.mxu0 %v623
    %v711 = vpop.f32.mrf.mxu0
    %v712 = vadd.f32 %v628, %v711
    %v713 = vpop.f32.mrf.mxu0
    %v714 = vpop.f32.mrf.mxu0
    %v715 = vpop.f32.mrf.mxu0
    %716 = vdwg.mxu0
    %v717 = vadd.f32 %v495, %v712
    %v718 = vld [vmem:[%s4 + $0xa] sm:$0x1]
    %v719 = vld [vmem:[%s4 + $0xb] sm:$0x1]
    %720 = vadd.xlane.f32.xlu0 %v717
    %v721 = vpop.xlane.xlu0 %720
    %v722 = vmul.f32 %v721, %v338
    %v723 = vmul.f32 %v717, %v717
    %724 = vadd.xlane.f32.xlu0 %v723
    %v725 = vpop.xlane.xlu0 %724
    %v726 = vmul.f32 %v725, %v338
    %v727 = vmul.f32 %v722, %v722
    %v728 = vsub.f32 %v726, %v727
    %v729 = vsub.f32 %v717, %v722
    %v730 = vadd.f32 %v728, 1e-05
    %v731 = vrsqrt.pop %v730
    %v732 = vmul.f32 %v729, %v731
    %v733 = vlaneseq
    %v734 = vshrl.u32 %v733, 7
    %v735 = vsub.s32 0, %v734
    %v736 = vrot.slane %v718, %v735
    %v737 = vmul.f32 %v732, %v736
    %v738 = vlaneseq
    %v739 = vshrl.u32 %v738, 7
    %v740 = vsub.s32 0, %v739
    %v741 = vrot.slane %v719, %v740
    %v742 = vadd.f32 %v737, %v741
    %743 = vst [vmem:[#allocation6] sm:$0xff] %v742
    %v744 = vld [vmem:[#allocation2 + $0x140] sm:$0xf]
    %v745 = vld [vmem:[#allocation2 + $0x144] sm:$0xf]
    %v746 = vld [vmem:[#allocation2 + $0x148] sm:$0xf]
    %v747 = vld [vmem:[#allocation2 + $0x14c] sm:$0xf]
    %v748 = vld [vmem:[#allocation2 + $0x150] sm:$0xf]
    %v749 = vld [vmem:[#allocation2 + $0x154] sm:$0xf]
    %v750 = vld [vmem:[#allocation2 + $0x158] sm:$0xf]
    %v751 = vld [vmem:[#allocation2 + $0x15c] sm:$0xf]
    %v752 = vld [vmem:[#allocation2 + $0x160] sm:$0xf]
    %v753 = vld [vmem:[#allocation2 + $0x164] sm:$0xf]
    %v754 = vld [vmem:[#allocation2 + $0x168] sm:$0xf]
    %v755 = vld [vmem:[#allocation2 + $0x16c] sm:$0xf]
    %v756 = vld [vmem:[#allocation2 + $0x170] sm:$0xf]
    %v757 = vld [vmem:[#allocation2 + $0x174] sm:$0xf]
    %v758 = vld [vmem:[#allocation2 + $0x178] sm:$0xf]
    %v759 = vld [vmem:[#allocation2 + $0x17c] sm:$0xf]
    %v760 = vpack.c.bf16 %v742, %v742
    %v761 = vld [vmem:[%s4 + $0xc] sm:$0x1]
    %v762 = vlaneseq
    %v763 = vshrl.u32 %v762, 7
    %v764 = vsub.s32 0, %v763
    %v765 = vrot.slane %v761, %v764
    %v782 = vunpack.c.l.b16 %v744
    %v783 = vunpack.c.l.b16 %v745
    %v784 = vunpack.c.l.b16 %v746
    %v785 = vunpack.c.l.b16 %v747
    %v786 = vunpack.c.l.b16 %v748
    %v787 = vunpack.c.l.b16 %v749
    %v788 = vunpack.c.l.b16 %v750
    %v789 = vunpack.c.l.b16 %v751
    %v790 = vunpack.c.l.b16 %v752
    %v791 = vunpack.c.l.b16 %v753
    %v792 = vunpack.c.l.b16 %v754
    %v793 = vunpack.c.l.b16 %v755
    %v794 = vunpack.c.l.b16 %v756
    %v795 = vunpack.c.l.b16 %v757
    %v796 = vunpack.c.l.b16 %v758
    %v797 = vunpack.c.l.b16 %v759
    %v798 = vpack.c.b16 %v783, %v782
    %v799 = vpack.c.b16 %v785, %v784
    %v800 = vpack.c.b16 %v787, %v786
    %v801 = vpack.c.b16 %v789, %v788
    %v802 = vpack.c.b16 %v791, %v790
    %v803 = vpack.c.b16 %v793, %v792
    %v804 = vpack.c.b16 %v795, %v794
    %v805 = vpack.c.b16 %v797, %v796
    %814 = vmatprep.subr.bf16.mxu0 0
    %815 = vmatpush1.bf16.msra.mxu0 %v805
    %816 = vmatprep.subr.bf16.mxu0 0
    %817 = vmatpush1.bf16.msra.mxu0 %v804
    %818 = vmatprep.subr.bf16.mxu0 0
    %819 = vmatpush1.bf16.msra.mxu0 %v803
    %820 = vmatprep.subr.bf16.mxu0 0
    %821 = vmatpush1.bf16.msra.mxu0 %v802
    %822 = vmatprep.subr.bf16.mxu0 0
    %823 = vmatpush1.bf16.msra.mxu0 %v801
    %824 = vmatprep.subr.bf16.mxu0 0
    %825 = vmatpush1.bf16.msra.mxu0 %v800
    %826 = vmatprep.subr.bf16.mxu0 0
    %827 = vmatpush1.bf16.msra.mxu0 %v799
    %828 = vmatprep.subr.bf16.mxu0 0
    %829 = vmatpush1.bf16.msra.mxu0 %v798
    %830 = vmatprep.subr.bf16.mxu0 0
    %831 = vmatpush2.bf16.msra.mxu0 0
    %832 = vmatprep.subr.bf16.mxu0 0
    %833 = vmatpush2.bf16.msra.mxu0 0
    %834 = vmatprep.subr.bf16.mxu0 0
    %835 = vmatpush2.bf16.msra.mxu0 0
    %836 = vmatprep.subr.bf16.mxu0 0
    %837 = vmatpush2.bf16.msra.mxu0 0
    %838 = vmatprep.subr.bf16.mxu0 0
    %839 = vmatpush2.bf16.msra.mxu0 0
    %840 = vmatprep.subr.bf16.mxu0 0
    %841 = vmatpush2.bf16.msra.mxu0 0
    %842 = vmatprep.subr.bf16.mxu0 0
    %843 = vmatpush2.bf16.msra.mxu0 0
    %844 = vmatprep.subr.bf16.mxu0 0
    %845 = vmatpush2.bf16.msra.mxu0 0
    %846 = vmatprep.mubr.bf16.mxu0 0
    %847 = vmatmul.mubr.bf16.gmra.mxu0 %v760
    %v848 = vpop.f32.mrf.mxu0
    %v849 = vadd.f32 %v765, %v848
    %v850 = vpop.f32.mrf.mxu0
    %v851 = vpop.f32.mrf.mxu0
    %v852 = vpop.f32.mrf.mxu0
    %853 = vdwg.mxu0
    %v854 = vmax.f32 %v849, 0.0
    %v855 = vld [vmem:[%s3] sm:$0xf]
    %v856 = vld [vmem:[%s3 + $0x4] sm:$0xf]
    %v857 = vld [vmem:[%s3 + $0x8] sm:$0xf]
    %v858 = vld [vmem:[%s3 + $0xc] sm:$0xf]
    %v859 = vld [vmem:[%s3 + $0x10] sm:$0xf]
    %v860 = vld [vmem:[%s3 + $0x14] sm:$0xf]
    %v861 = vld [vmem:[%s3 + $0x18] sm:$0xf]
    %v862 = vld [vmem:[%s3 + $0x1c] sm:$0xf]
    %v863 = vld [vmem:[%s3 + $0x20] sm:$0xf]
    %v864 = vld [vmem:[%s3 + $0x24] sm:$0xf]
    %v865 = vld [vmem:[%s3 + $0x28] sm:$0xf]
    %v866 = vld [vmem:[%s3 + $0x2c] sm:$0xf]
    %v867 = vld [vmem:[%s3 + $0x30] sm:$0xf]
    %v868 = vld [vmem:[%s3 + $0x34] sm:$0xf]
    %v869 = vld [vmem:[%s3 + $0x38] sm:$0xf]
    %v870 = vld [vmem:[%s3 + $0x3c] sm:$0xf]
    %v871 = vpack.c.bf16 %v854, %v854
    %v872 = vld [vmem:[%s4 + $0xd] sm:$0x1]
    %v873 = vlaneseq
    %v874 = vshrl.u32 %v873, 7
    %v875 = vsub.s32 0, %v874
    %v876 = vrot.slane %v872, %v875
    %v893 = vunpack.c.l.b16 %v855
    %v894 = vunpack.c.l.b16 %v856
    %v895 = vunpack.c.l.b16 %v857
    %v896 = vunpack.c.l.b16 %v858
    %v897 = vunpack.c.l.b16 %v859
    %v898 = vunpack.c.l.b16 %v860
    %v899 = vunpack.c.l.b16 %v861
    %v900 = vunpack.c.l.b16 %v862
    %v901 = vunpack.c.l.b16 %v863
    %v902 = vunpack.c.l.b16 %v864
    %v903 = vunpack.c.l.b16 %v865
    %v904 = vunpack.c.l.b16 %v866
    %v905 = vunpack.c.l.b16 %v867
    %v906 = vunpack.c.l.b16 %v868
    %v907 = vunpack.c.l.b16 %v869
    %v908 = vunpack.c.l.b16 %v870
    %v909 = vpack.c.b16 %v894, %v893
    %v910 = vpack.c.b16 %v896, %v895
    %v911 = vpack.c.b16 %v898, %v897
    %v912 = vpack.c.b16 %v900, %v899
    %v913 = vpack.c.b16 %v902, %v901
    %v914 = vpack.c.b16 %v904, %v903
    %v915 = vpack.c.b16 %v906, %v905
    %v916 = vpack.c.b16 %v908, %v907
    %925 = vmatprep.subr.bf16.mxu0 0
    %926 = vmatpush1.bf16.msra.mxu0 %v916
    %927 = vmatprep.subr.bf16.mxu0 0
    %928 = vmatpush1.bf16.msra.mxu0 %v915
    %929 = vmatprep.subr.bf16.mxu0 0
    %930 = vmatpush1.bf16.msra.mxu0 %v914
    %931 = vmatprep.subr.bf16.mxu0 0
    %932 = vmatpush1.bf16.msra.mxu0 %v913
    %933 = vmatprep.subr.bf16.mxu0 0
    %934 = vmatpush1.bf16.msra.mxu0 %v912
    %935 = vmatprep.subr.bf16.mxu0 0
    %936 = vmatpush1.bf16.msra.mxu0 %v911
    %937 = vmatprep.subr.bf16.mxu0 0
    %938 = vmatpush1.bf16.msra.mxu0 %v910
    %939 = vmatprep.subr.bf16.mxu0 0
    %940 = vmatpush1.bf16.msra.mxu0 %v909
    %941 = vmatprep.subr.bf16.mxu0 0
    %942 = vmatpush2.bf16.msra.mxu0 0
    %943 = vmatprep.subr.bf16.mxu0 0
    %944 = vmatpush2.bf16.msra.mxu0 0
    %945 = vmatprep.subr.bf16.mxu0 0
    %946 = vmatpush2.bf16.msra.mxu0 0
    %947 = vmatprep.subr.bf16.mxu0 0
    %948 = vmatpush2.bf16.msra.mxu0 0
    %949 = vmatprep.subr.bf16.mxu0 0
    %950 = vmatpush2.bf16.msra.mxu0 0
    %951 = vmatprep.subr.bf16.mxu0 0
    %952 = vmatpush2.bf16.msra.mxu0 0
    %953 = vmatprep.subr.bf16.mxu0 0
    %954 = vmatpush2.bf16.msra.mxu0 0
    %955 = vmatprep.subr.bf16.mxu0 0
    %956 = vmatpush2.bf16.msra.mxu0 0
    %957 = vmatprep.mubr.bf16.mxu0 0
    %958 = vmatmul.mubr.bf16.gmra.mxu0 %v871
    %v959 = vpop.f32.mrf.mxu0
    %v960 = vadd.f32 %v876, %v959
    %v961 = vpop.f32.mrf.mxu0
    %v962 = vpop.f32.mrf.mxu0
    %v963 = vpop.f32.mrf.mxu0
    %964 = vdwg.mxu0
    %966 = vrot.lane.b32.xlu0 %v960, 127
    %v967 = vpop.permute.xlu0 %966
    %vm969 = vcmask 121856
    %v970 = vsel %vm969, %v967, 0.0
    %971 = vadd.xlane.f32.xlu0 %v970
    %v972 = vpop.xlane.xlu0 %971
    %v973 = vrcp.pop 15.0
    %v974 = vmul.f32 %v972, %v973
    %v975 = vsub.f32 %v960, %v974
    %976 = vset.pattern.permute.xlu0 0
    %977 = vperm.xlu0 %976, %v960
    %v978 = vpop.permute.xlu0 %977
    %v980 = vadd.f32 %v978, %v975
    %982 = vrot.lane.b32.xlu0 %v980, 127
    %v983 = vpop.permute.xlu0 %982
    %985 = vst.msk [vmem:[#allocation5] sm:$0xff] %vm969, %v983
    // Predicated region
    $region26: #{tpu_custom_call.1} parent=1 // pred_check
      _
    $region27: #{tpu_custom_call.1} parent=1 // pred_check_branch
      %987 = sbr.rel (0) target = $region29
    $region28: #{tpu_custom_call.1} parent=1 // pred_region
      %s989 = ssub.s32 128, 128
      %990 = vsyncadd [#allocation4], %s989
      %s992 = sshll.u32 [#allocation5], 4
      %s993 = int_to_ptr.vmem [resolvable:$true] %s992
      %995 = dma.vmem_to_hbm [thread:$0]  %s993, 128, %s5, [#allocation4]
    $region29: #{tpu_custom_call.1} parent=1 // pred_fallthru
      _
    // Predicated region
    $region30: #{tpu_custom_call.1} parent=1 // pred_check
      _
    $region31: #{tpu_custom_call.1} parent=1 // pred_check_branch
      %997 = sbr.rel (0) target = $region33
    $region32: #{tpu_custom_call.1} parent=1 // pred_region
      %s999 = ssub.s32 128, 128
      %1000 = vsyncadd [#allocation7], %s999
      %s1002 = sshll.u32 [#allocation6], 4
      %s1003 = int_to_ptr.vmem [resolvable:$true] %s1002
      %1005 = dma.vmem_to_hbm [thread:$0]  %s1003, 128, %s6, [#allocation7]
    $region33: #{tpu_custom_call.1} parent=1 // pred_fallthru
      _
    // Predicated region
    $region34: #{tpu_custom_call.1} parent=1 // pred_check
      _
    $region35: #{tpu_custom_call.1} parent=1 // pred_check_branch
      %1007 = sbr.rel (0) target = $region37
    $region36: #{tpu_custom_call.1} parent=1 // pred_region
      %1008 = dma.done [#allocation4], 128
    $region37: #{tpu_custom_call.1} parent=1 // pred_fallthru
      _
    // Predicated region
    $region38: #{tpu_custom_call.1} parent=1 // pred_check
      _
    $region39: #{tpu_custom_call.1} parent=1 // pred_check_branch
      %1010 = sbr.rel (0) target = $region41
    $region40: #{tpu_custom_call.1} parent=1 // pred_region
      %1011 = dma.done [#allocation7], 128
    $region41: #{tpu_custom_call.1} parent=1 // pred_fallthru
      _
    %1012 = vsyncpa [#allocation3], 1
    %1013 = vsyncpa [#allocation4], 1
    %1014 = vsyncpa [#allocation7], 1

</llo_original>
